<compile_context>
chip_gen: v7x
topology: tpu7x:2x2x1
jax: 0.10.0
libtpu: 0.0.40
codegen_flags: <defaults>
</compile_context>

<pallas_src>
import jax
import jax.numpy as jnp
from jax.experimental import pallas as pl
from jax.experimental.pallas import tpu as pltpu

_MiB = 1024 * 1024
# ~8 MiB x tiles: DMA time (~2.4 us even at v7x 3.2 TB/s) >> 0.35 us/step
# overhead, and already past the measured ~86%-of-roofline knee on v5e/v6e.
_TARGET_TILE_BYTES = 8 * _MiB
_MAX_TB = 4096          # batch-tile row cap (perf review: 2048-4096)
_SPLIT_2TC_MIN_B = 128  # above this, force >= 2 batch tiles (v7x has 2 TCs)


def _round_up(x, m):
    return ((x + m - 1) // m) * m


def _vmem_capacity_bytes():
    """Per-generation VMEM capacity (v5e/v6e: 128 MiB, v7x: 64 MiB per TC)."""
    try:
        cap = int(pltpu.get_tpu_info().vmem_capacity_bytes)
        if cap > 0:
            return cap
    except Exception:
        pass
    return 64 * _MiB  # conservative default (v7x per-TensorCore)


def _choose_tiles(B, D, itemsize, vmem_cap):
    """Pick (TB, TK, Bp, Dp): batch / feature tile sizes and padded dims."""
    # Per-x-buffer budget: x is double buffered; leave plenty of room for the
    # weight tiles, output blocks, accumulator scratch and compiler temps.
    per_buf = max(2 * _MiB, min(vmem_cap * 3 // 8, 24 * _MiB))
    target = min(_TARGET_TILE_BYTES, per_buf)
    row_bytes = D * itemsize

    if 128 * row_bytes <= target:
        # Full-D rows fit comfortably: tile the batch only (single K step).
        TK, Dp = D, D
        if B <= _SPLIT_2TC_MIN_B:
            TB = max(8, _round_up(B, 8))  # single step covering the batch
        else:
            TB = min(_MAX_TB, max(128, (target // row_bytes) // 128 * 128))
            # Guarantee >= 2 grid steps so the "parallel" batch axis can be
            # sharded across both TensorCores on v7x.
            TB = min(TB, _round_up(-(-B // 2), 128))
        Bp = _round_up(B, TB)
    else:
        # Very large D: add a K (reduction) grid axis so the double-buffered
        # x block stays bounded for any D (critical on v7x's 64 MiB VMEM).
        TB = max(8, _round_up(B, 8)) if B <= 512 else 512
        TK = max(128, (target // (TB * itemsize)) // 128 * 128)
        TK = min(TK, _round_up(D, 128))
        Bp = _round_up(B, TB)
        Dp = _round_up(D, TK)
    return TB, TK, Bp, Dp


def _vmem_limit_bytes(TB, TK, itemsize, w_itemsize, vmem_cap):
    """Explicit scoped-VMEM limit for the chosen tiles (+ headroom)."""
    x_buf = TB * TK * itemsize          # streamed x tile
    w_buf = 8 * TK * w_itemsize         # (1, TK) pads to 8 sublanes
    o_buf = 8 * TB * itemsize           # (1, TB) lane-dense output block
    acc = 8 * TB * 4                    # f32 accumulator scratch
    need = 2 * x_buf + 2 * w_buf + 2 * o_buf + acc   # double-buffered pipeline
    limit = need * 3 // 2 + 4 * _MiB                 # headroom for temps
    limit = max(limit, 32 * _MiB)
    limit = min(limit, max(vmem_cap - 8 * _MiB, 32 * _MiB))
    return int(limit)


def _linear_kernel(w_ref, b_ref, x_ref, o_ref, acc_ref):
    # w_ref:   (1, TK)  VMEM weight tile (tiny; cheap to re-stream)
    # b_ref:   (1, 1)   SMEM scalar bias
    # x_ref:   (TB, TK) VMEM streamed x tile
    # o_ref:   (1, TB)  VMEM lane-dense output row (resident across K steps)
    # acc_ref: (1, TB)  f32 VMEM accumulator scratch
    k = pl.program_id(1)

    @pl.when(k == 0)
    def _init():
        acc_ref[...] = jnp.zeros_like(acc_ref)

    # (1, TK) . (TB, TK)^T -> (1, TB).  M == 1 keeps MXU cost negligible; the
    # trans_b-style contraction avoids relaying out the big streamed tile.
    acc_ref[...] += jax.lax.dot_general(
        w_ref[...], x_ref[...],
        dimension_numbers=(((1,), (1,)), ((), ())),   # contract over D
        preferred_element_type=jnp.float32,
    )

    @pl.when(k == pl.num_programs(1) - 1)
    def _finalize():
        o_ref[...] = (acc_ref[...] + b_ref[0, 0]).astype(o_ref.dtype)


def simple_linear_classifier(x, weight, bias):
    """Pallas-TPU forward of nn.Linear(D, 1): x (B, D) -> (B, 1)."""
    B, D = x.shape
    dtype = x.dtype
    itemsize = jnp.dtype(dtype).itemsize

    vmem_cap = _vmem_capacity_bytes()
    TB, TK, Bp, Dp = _choose_tiles(B, D, itemsize, vmem_cap)
    nb, nk = Bp // TB, Dp // TK

    # Zero padding: padded D columns contribute nothing to the dot product;
    # padded batch rows (bias-valued outputs) are sliced off below.
    if (Bp, Dp) != (B, D):
        x = jnp.pad(x, ((0, Bp - B), (0, Dp - D)))

    # Deliberate precision choice: weights follow x.dtype (as if the PyTorch
    # module ran in that dtype); accumulation stays f32.
    w2d = weight.reshape(1, D).astype(dtype)
    if Dp != D:
        w2d = jnp.pad(w2d, ((0, 0), (0, Dp - D)))
    b2d = bias.reshape(1, 1).astype(jnp.float32)
    w_itemsize = jnp.dtype(w2d.dtype).itemsize

    vmem_limit = _vmem_limit_bytes(TB, TK, itemsize, w_itemsize, vmem_cap)

    out_row = pl.pallas_call(
        _linear_kernel,
        out_shape=jax.ShapeDtypeStruct((1, Bp), dtype),
        grid_spec=pltpu.PrefetchScalarGridSpec(
            num_scalar_prefetch=0,
            grid=(nb, nk),                                           # K last
            in_specs=[
                pl.BlockSpec((1, TK), lambda i, k: (0, k)),          # weight
                pl.BlockSpec(memory_space=pltpu.MemorySpace.SMEM),   # bias
                pl.BlockSpec((TB, TK), lambda i, k: (i, k)),         # x tiles
            ],
            out_specs=pl.BlockSpec((1, TB), lambda i, k: (0, i)),    # lane-dense
            scratch_shapes=[pltpu.VMEM((1, TB), jnp.float32)],
        ),
        compiler_params=pltpu.CompilerParams(
            dimension_semantics=("parallel", "arbitrary"),
            vmem_limit_bytes=vmem_limit,
        ),
        cost_estimate=pl.CostEstimate(
            flops=2 * Bp * Dp,
            transcendentals=0,
            bytes_accessed=Bp * Dp * itemsize + Dp * w_itemsize
            + Bp * itemsize + 4,
        ),
    )(w2d, b2d, x)

    # Layout plumbing only: (1, Bp) lane-dense row -> (B, 1) nn.Linear shape.
    return out_row[0, :B].reshape(B, 1)


if __name__ == "__main__":
    batch, input_dim = 8, 32

    key = jax.random.PRNGKey(0)
    kx, kw, kb = jax.random.split(key, 3)

    # Deterministic "PyTorch-like" init: U(-1/sqrt(D), 1/sqrt(D))
    bound = 1.0 / jnp.sqrt(jnp.float32(input_dim))
    weight = jax.random.uniform(kw, (1, input_dim), jnp.float32, -bound, bound)
    bias = jax.random.uniform(kb, (1,), jnp.float32, -bound, bound)

    x = jax.random.normal(kx, (batch, input_dim), jnp.float32)

    out = simple_linear_classifier(x, weight, bias)
    out = jax.block_until_ready(out)

    # Sanity check against plain-JAX reference.
    ref = x @ weight.T + bias
    assert out.shape == (batch, 1)
    assert jnp.allclose(out, ref, atol=1e-5, rtol=1e-5)

    print("KERNEL_OK")
</pallas_src>

<mosaic_0001>
module attributes {stable_mosaic.version = 11 : i64} {
  func.func @_linear_kernel(%arg0: i32, %arg1: i32, %arg2: memref<1x32xf32, #tpu.memory_space<vmem>>, %arg3: memref<1x1xf32, #tpu.memory_space<smem>>, %arg4: memref<8x32xf32, #tpu.memory_space<vmem>>, %arg5: memref<1x8xf32, #tpu.memory_space<vmem>>, %arg6: memref<1x8xf32, #tpu.memory_space<vmem>>) attributes {dimension_semantics = [#tpu.dimension_semantics<parallel>, #tpu.dimension_semantics<arbitrary>], iteration_bounds = array<i64: 1, 1>, scalar_prefetch = 0 : i64, scratch_operands = 1 : i64, tpu.core_type = #tpu.core_type<tc>, window_params = [{transform_indices = @transform_0, window_bounds = array<i64: 1, 32>}, {transform_indices = @transform_1, window_bounds = array<i64: 1, 1>}, {transform_indices = @transform_2, window_bounds = array<i64: 8, 32>}, {transform_indices = @transform_3, window_bounds = array<i64: 1, 8>}]} {
    %c0_i32 = arith.constant 0 : i32
    %0 = arith.cmpi eq, %arg1, %c0_i32 : i32
    %1 = arith.extui %0 : i1 to i32
    %c0_i32_0 = arith.constant 0 : i32
    %2 = arith.cmpi ne, %1, %c0_i32_0 : i32
    scf.if %2 {
      %cst_10 = arith.constant 0.000000e+00 : f32
      %12 = vector.broadcast %cst_10 : f32 to vector<1x8xf32>
      %c0_11 = arith.constant 0 : index
      %c0_12 = arith.constant 0 : index
      %13 = vector.load %arg6[%c0_11, %c0_12] : memref<1x8xf32, #tpu.memory_space<vmem>>, vector<1x8xf32>
      tpu.vector_store %arg6[%c0_11, %c0_12], %12 {strides = array<i32>} : memref<1x8xf32, #tpu.memory_space<vmem>>, vector<1x8xf32>,
    } else {
    }
    %c0 = arith.constant 0 : index
    %c0_1 = arith.constant 0 : index
    %3 = vector.load %arg6[%c0, %c0_1] : memref<1x8xf32, #tpu.memory_space<vmem>>, vector<1x8xf32>
    %c0_2 = arith.constant 0 : index
    %c0_3 = arith.constant 0 : index
    %4 = vector.load %arg2[%c0_2, %c0_3] : memref<1x32xf32, #tpu.memory_space<vmem>>, vector<1x32xf32>
    %c0_4 = arith.constant 0 : index
    %c0_5 = arith.constant 0 : index
    %5 = vector.load %arg4[%c0_4, %c0_5] : memref<8x32xf32, #tpu.memory_space<vmem>>, vector<8x32xf32>
    %cst = arith.constant dense<0.000000e+00> : vector<1x8xf32>
    %6 = tpu.matmul %4, %5, %cst {dimension_numbers = #tpu.dot_dimension_numbers<[1], [1], [0], [0], [0, 0, 1, 0], [], []>} : vector<1x32xf32>, vector<8x32xf32>, vector<1x8xf32> -> vector<1x8xf32>
    %7 = arith.addf %3, %6 : vector<1x8xf32>
    %c0_6 = arith.constant 0 : index
    %c0_7 = arith.constant 0 : index
    %8 = vector.load %arg6[%c0_6, %c0_7] : memref<1x8xf32, #tpu.memory_space<vmem>>, vector<1x8xf32>
    tpu.vector_store %arg6[%c0_6, %c0_7], %7 {strides = array<i32>} : memref<1x8xf32, #tpu.memory_space<vmem>>, vector<1x8xf32>,
    %c0_i32_8 = arith.constant 0 : i32
    %9 = arith.cmpi eq, %arg1, %c0_i32_8 : i32
    %10 = arith.extui %9 : i1 to i32
    %c0_i32_9 = arith.constant 0 : i32
    %11 = arith.cmpi ne, %10, %c0_i32_9 : i32
    scf.if %11 {
      %c0_10 = arith.constant 0 : index
      %c0_11 = arith.constant 0 : index
      %12 = vector.load %arg6[%c0_10, %c0_11] : memref<1x8xf32, #tpu.memory_space<vmem>>, vector<1x8xf32>
      %c0_12 = arith.constant 0 : index
      %c0_13 = arith.constant 0 : index
      %13 = memref.load %arg3[%c0_12, %c0_13] : memref<1x1xf32, #tpu.memory_space<smem>>
      %14 = vector.broadcast %13 : f32 to vector<1x8xf32>
      %15 = arith.addf %12, %14 : vector<1x8xf32>
      %c0_14 = arith.constant 0 : index
      %c0_15 = arith.constant 0 : index
      %16 = vector.load %arg5[%c0_14, %c0_15] : memref<1x8xf32, #tpu.memory_space<vmem>>, vector<1x8xf32>
      tpu.vector_store %arg5[%c0_14, %c0_15], %15 {strides = array<i32>} : memref<1x8xf32, #tpu.memory_space<vmem>>, vector<1x8xf32>,
    } else {
    }
    return
  }
  func.func @transform_0(%arg0: i32, %arg1: i32) -> (i32, i32) {
    %c0_i32 = arith.constant 0 : i32
    %c0_i32_0 = arith.constant 0 : i32
    return %c0_i32, %arg1 : i32, i32
  }
  func.func @transform_1(%arg0: i32, %arg1: i32) -> (i32, i32) {
    %c0_i32 = arith.constant 0 : i32
    %c0_i32_0 = arith.constant 0 : i32
    %c0_i32_1 = arith.constant 0 : i32
    return %c0_i32, %c0_i32_0 : i32, i32
  }
  func.func @transform_2(%arg0: i32, %arg1: i32) -> (i32, i32) {
    %c0_i32 = arith.constant 0 : i32
    return %arg0, %arg1 : i32, i32
  }
  func.func @transform_3(%arg0: i32, %arg1: i32) -> (i32, i32) {
    %c0_i32 = arith.constant 0 : i32
    %c0_i32_0 = arith.constant 0 : i32
    return %c0_i32, %arg0 : i32, i32
  }
}

</mosaic_0001>

<llo_original>
// kernel: tpu_custom_call.1
$region0: #{tpu_custom_call.1}
  #allocation0 [shape = 'u32[]', space=smem, size = 0x4, offset = 0x4, fixed_abs, tag = 'smem constant byte address 0x4 - core index']
  #allocation1 [shape = 'u32[144,128]{1,0:T(1,128)}', space=vmem, size = 0x12000, scoped, tag = 'internal scratch']
  #allocation2 [shape = 'f32[1,8]{1,0:T(1,128)}', space=vmem, size = 0x200, scoped, tag = 'scratch operand']
  #allocation3 [shape = 'f32[1,1]{1,0:T(1,128)S(6)}', space=smem, size = 0x200, scoped, tag = 'scoped memory for tpu_custom_call.1']
  %s0 = inlined_call_operand.vmem [shape: f32[1,32], index: 0, kind: input, shape index: {}]
  %s1 = inlined_call_operand.<no memory space> [shape: f32[1,1], index: 1, kind: input, shape index: {}]
  %s2 = inlined_call_operand.hbm [shape: f32[8,32], index: 2, kind: input, shape index: {}]
  %s3 = inlined_call_operand.hbm [shape: f32[1,8], index: 3, kind: output, shape index: {}]
  %s4 = sld [smem:[#allocation0]]
  $region34: #{tpu_custom_call.1} parent=0
    _
  %s6 = ssub.s32 1, %s4
  %s7 = scalar_select 0, %s6, %s4
  %8 = sst [smem:[#allocation3]] %s1
  $region1: #{tpu_custom_call.1} parent=0
    #allocation4 [shape = 'u8[4096]{0}', space=vmem, size = 0x1000, scoped, tag = 'input window, operand 2, single buffered']
    #allocation5 [shape = 's32[1]{0}', space=sflag, size = 0x4, scoped, tag = 'scoped memory for tpu_custom_call.1']
    #allocation6 [shape = 's32[1]{0}', space=sflag, size = 0x4, scoped, tag = 'scoped memory for tpu_custom_call.1']
    #allocation7 [shape = 'u8[512]{0}', space=vmem, size = 0x400, scoped, tag = 'output window, operand 0, single buffered']
    %9 = vsyncpa [#allocation5], 0
    %10 = vsyncpa [#allocation6], 0
    // Predicated region
    $region2: #{tpu_custom_call.1} parent=1 // pred_check
      _
    $region3: #{tpu_custom_call.1} parent=1 // pred_check_branch
      %12 = sbr.rel (0) target = $region5
    $region4: #{tpu_custom_call.1} parent=1 // pred_region
      _
    $region5: #{tpu_custom_call.1} parent=1 // pred_fallthru
      _
    // Predicated region
    $region6: #{tpu_custom_call.1} parent=1 // pred_check
      _
    $region7: #{tpu_custom_call.1} parent=1 // pred_check_branch
      %14 = sbr.rel (0) target = $region9
    $region8: #{tpu_custom_call.1} parent=1 // pred_region
      _
    $region9: #{tpu_custom_call.1} parent=1 // pred_fallthru
      _
    // Predicated region
    $region10: #{tpu_custom_call.1} parent=1 // pred_check
      _
    $region11: #{tpu_custom_call.1} parent=1 // pred_check_branch
      %16 = sbr.rel (0) target = $region13
    $region12: #{tpu_custom_call.1} parent=1 // pred_region
      %s18 = ssub.s32 128, 128
      %19 = vsyncadd [#allocation5], %s18
      %s21 = sshll.u32 [#allocation4], 4
      %s22 = int_to_ptr.vmem [resolvable:$true] %s21
      %24 = dma.hbm_to_vmem [thread:$0]  %s2, 128, %s22, [#allocation5]
    $region13: #{tpu_custom_call.1} parent=1 // pred_fallthru
      _
    // Predicated region
    $region14: #{tpu_custom_call.1} parent=1 // pred_check
      _
    $region15: #{tpu_custom_call.1} parent=1 // pred_check_branch
      %26 = sbr.rel (0) target = $region17
    $region16: #{tpu_custom_call.1} parent=1 // pred_region
      %27 = dma.done [#allocation5], 128
    $region17: #{tpu_custom_call.1} parent=1 // pred_fallthru
      _
    %p28 = scmp.eq.s32.totalorder 0, 0
    // Predicated region
    $region18: #{tpu_custom_call.1} parent=1 // pred_check
      %p29 = pneg %p28
    $region19: #{tpu_custom_call.1} parent=1 // pred_check_branch
      %31 = sbr.rel (%p29) target = $region21
    $region20: #{tpu_custom_call.1} parent=1 // pred_region
      %vm32 = vcmask 57344
      %33 = vst.msk [vmem:[#allocation2] sm:$0x1] %vm32, 0.0
    $region21: #{tpu_custom_call.1} parent=1 // pred_fallthru
      _
    %v34 = vld [vmem:[#allocation2] sm:$0x1]
    %v35 = vld [vmem:[%s0] sm:$0x1]
    %v36 = vld [vmem:[#allocation4] sm:$0xff]
    %vm37 = vcmask 261120
    %v39 = vsel %vm37, %v35, 0
    %v42 = vsel %vm37, %v36, 0
    %44 = vmatprep.subr.mxu0 0.0
    %45 = vmatpush1.xpose.msra.mxu0 %v42
    %46 = vmatprep.subr.mxu0 0.0
    %47 = vmatpush1.xpose.msra.mxu0 0.0
    %48 = vmatprep.subr.mxu0 0.0
    %49 = vmatpush1.xpose.msra.mxu0 0.0
    %50 = vmatprep.subr.mxu0 0.0
    %51 = vmatpush1.xpose.msra.mxu0 0.0
    %52 = vmatprep.subr.mxu0 0.0
    %53 = vmatpush1.xpose.msra.mxu0 0.0
    %54 = vmatprep.subr.mxu0 0.0
    %55 = vmatpush1.xpose.msra.mxu0 0.0
    %56 = vmatprep.subr.mxu0 0.0
    %57 = vmatpush1.xpose.msra.mxu0 0.0
    %58 = vmatprep.subr.mxu0 0.0
    %59 = vmatpush1.xpose.msra.mxu0 0.0
    %60 = vmatprep.subr.mxu0 0.0
    %61 = vmatpush1.xpose.msra.mxu0 0.0
    %62 = vmatprep.subr.mxu0 0.0
    %63 = vmatpush1.xpose.msra.mxu0 0.0
    %64 = vmatprep.subr.mxu0 0.0
    %65 = vmatpush1.xpose.msra.mxu0 0.0
    %66 = vmatprep.subr.mxu0 0.0
    %67 = vmatpush1.xpose.msra.mxu0 0.0
    %68 = vmatprep.subr.mxu0 0.0
    %69 = vmatpush1.xpose.msra.mxu0 0.0
    %70 = vmatprep.subr.mxu0 0.0
    %71 = vmatpush1.xpose.msra.mxu0 0.0
    %72 = vmatprep.subr.mxu0 0.0
    %73 = vmatpush1.xpose.msra.mxu0 0.0
    %74 = vmatprep.subr.mxu0 0.0
    %75 = vmatpush1.xpose.msra.mxu0 0.0
    %76 = vmatprep.subr.mxu0 0.0
    %77 = vmatpush1.xpose.msra.mxu0 0.0
    %78 = vmatprep.subr.mxu0 0.0
    %79 = vmatpush1.xpose.msra.mxu0 0.0
    %80 = vmatprep.subr.mxu0 0.0
    %81 = vmatpush1.xpose.msra.mxu0 0.0
    %82 = vmatprep.subr.mxu0 0.0
    %83 = vmatpush1.xpose.msra.mxu0 0.0
    %84 = vmatprep.subr.mxu0 0.0
    %85 = vmatpush1.xpose.msra.mxu0 0.0
    %86 = vmatprep.subr.mxu0 0.0
    %87 = vmatpush1.xpose.msra.mxu0 0.0
    %88 = vmatprep.subr.mxu0 0.0
    %89 = vmatpush1.xpose.msra.mxu0 0.0
    %90 = vmatprep.subr.mxu0 0.0
    %91 = vmatpush1.xpose.msra.mxu0 0.0
    %92 = vmatprep.subr.mxu0 0.0
    %93 = vmatpush1.xpose.msra.mxu0 0.0
    %94 = vmatprep.subr.mxu0 0.0
    %95 = vmatpush1.xpose.msra.mxu0 0.0
    %96 = vmatprep.subr.mxu0 0.0
    %97 = vmatpush1.xpose.msra.mxu0 0.0
    %98 = vmatprep.subr.mxu0 0.0
    %99 = vmatpush1.xpose.msra.mxu0 0.0
    %100 = vmatprep.subr.mxu0 0.0
    %101 = vmatpush1.xpose.msra.mxu0 0.0
    %102 = vmatprep.subr.mxu0 0.0
    %103 = vmatpush1.xpose.msra.mxu0 0.0
    %104 = vmatprep.subr.mxu0 0.0
    %105 = vmatpush1.xpose.msra.mxu0 0.0
    %106 = vmatprep.subr.mxu0 0.0
    %107 = vmatpush1.xpose.msra.mxu0 0.0
    %108 = vmatprep.mubr.f32.mxu0 0.0
    %109 = vmatmul.mubr.f32.gmra.mrb[0].mxu0 %v39
    %v110 = vpop.f32.mrb[0].mxu0
    %v111 = vadd.f32 0.0, %v110
    %v112 = vpop.f32.mrb[0].mxu0
    %113 = vdwg.mxu0
    %v114 = vadd.f32 %v34, %v111
    %vm115 = vcmask 57344
    %116 = vst.msk [vmem:[#allocation2] sm:$0x1] %vm115, %v114
    // Predicated region
    $region22: #{tpu_custom_call.1} parent=1 // pred_check
      %p117 = pneg %p28
    $region23: #{tpu_custom_call.1} parent=1 // pred_check_branch
      %119 = sbr.rel (%p117) target = $region25
    $region24: #{tpu_custom_call.1} parent=1 // pred_region
      %v120 = vld [vmem:[#allocation2] sm:$0x1]
      %s121 = sld [smem:[#allocation3]]
      %v122 = vstv %s121
      %v123 = vadd.f32 %v120, %v122
      %124 = vst.msk [vmem:[#allocation7] sm:$0x1] %vm115, %v123
    $region25: #{tpu_custom_call.1} parent=1 // pred_fallthru
      _
    // Predicated region
    $region26: #{tpu_custom_call.1} parent=1 // pred_check
      _
    $region27: #{tpu_custom_call.1} parent=1 // pred_check_branch
      %126 = sbr.rel (0) target = $region29
    $region28: #{tpu_custom_call.1} parent=1 // pred_region
      %s128 = ssub.s32 16, 16
      %129 = vsyncadd [#allocation6], %s128
      %s131 = sshll.u32 [#allocation7], 4
      %s132 = int_to_ptr.vmem [resolvable:$true] %s131
      %134 = dma.vmem_to_hbm [thread:$0]  %s132, 16, %s3, [#allocation6]
    $region29: #{tpu_custom_call.1} parent=1 // pred_fallthru
      _
    // Predicated region
    $region30: #{tpu_custom_call.1} parent=1 // pred_check
      _
    $region31: #{tpu_custom_call.1} parent=1 // pred_check_branch
      %136 = sbr.rel (0) target = $region33
    $region32: #{tpu_custom_call.1} parent=1 // pred_region
      %137 = dma.done [#allocation6], 16
    $region33: #{tpu_custom_call.1} parent=1 // pred_fallthru
      _
    %138 = vsyncpa [#allocation5], 1
    %139 = vsyncpa [#allocation6], 1

</llo_original>
